<compile_context>
chip_gen: v7x
topology: tpu7x:2x2x1
jax: 0.10.0
libtpu: 0.0.40
codegen_flags: <defaults>
</compile_context>

<pallas_src>
import functools

import jax
import jax.numpy as jnp
import numpy as np
from jax.experimental import pallas as pl
from jax.experimental.pallas import tpu as pltpu

_LANES = 128


def _smooth_l1_kernel(x_ref, y_ref, t_ref, out_ref, acc_ref, *, inv_n):
    """One (TM, 128) lane-dense tile of the masked SmoothL1 mean reduction."""
    i = pl.program_id(0)

    @pl.when(i == 0)
    def _():
        acc_ref[0, 0] = jnp.float32(0.0)

    # Mask once after the subtract: exact because t is a 0/1 mask
    # ((x - y) * t == x*t - y*t). Padded elements have t == 0 -> contribute 0.
    z = jnp.abs((x_ref[...] - y_ref[...]) * t_ref[...])
    # torch.nn.SmoothL1Loss default beta = 1.0
    elem = jnp.where(z < 1.0, 0.5 * z * z, z - 0.5)
    acc_ref[0, 0] += jnp.sum(elem)

    @pl.when(i == pl.num_programs(0) - 1)
    def _():
        # 'mean' reduction over the TRUE element count (multiply, no divide).
        out_ref[0, 0] = acc_ref[0, 0] * inv_n


def smooth_l1_loss(inputs, targets, xyzr, *, tm=512):
    """inputs: (N, 4) f32, targets: (N,) 0/1 mask, xyzr: any shape with N*4 elems."""
    n, c = inputs.shape
    assert c == 4
    xyzr_r = jnp.reshape(xyzr, (-1, 4))                  # == xyzr.view(-1, 4)
    assert xyzr_r.shape[0] == n

    n_elems = n * 4
    inv_n = 1.0 / float(n_elems)

    # ---- lane-dense repack in the wrapper (layout plumbing, not compute) ----
    x_flat = jnp.reshape(inputs.astype(jnp.float32), (-1,))
    y_flat = jnp.reshape(xyzr_r.astype(jnp.float32), (-1,))
    # targets.unsqueeze(1).float() broadcast over 4 coords == repeat by 4.
    t_flat = jnp.repeat(targets.astype(jnp.float32), 4)

    rows = pl.cdiv(n_elems, _LANES)
    # Tile rows: multiple of 8 (sublane), capped at `tm`, at least one tile.
    tile_rows = min(tm, max(8, ((rows + 7) // 8) * 8))
    padded_rows = ((rows + tile_rows - 1) // tile_rows) * tile_rows
    pad = padded_rows * _LANES - n_elems

    def _pack(v):
        return jnp.pad(v, (0, pad)).reshape(padded_rows, _LANES)

    x2 = _pack(x_flat)
    y2 = _pack(y_flat)
    t2 = _pack(t_flat)  # zero-padded mask -> padded elements contribute 0

    grid = (padded_rows // tile_rows,)

    out = pl.pallas_call(
        functools.partial(_smooth_l1_kernel, inv_n=inv_n),
        out_shape=jax.ShapeDtypeStruct((1, 1), jnp.float32),
        grid_spec=pltpu.PrefetchScalarGridSpec(
            num_scalar_prefetch=0,
            grid=grid,
            in_specs=[
                pl.BlockSpec((tile_rows, _LANES), lambda i: (i, 0)),
                pl.BlockSpec((tile_rows, _LANES), lambda i: (i, 0)),
                pl.BlockSpec((tile_rows, _LANES), lambda i: (i, 0)),
            ],
            out_specs=pl.BlockSpec(memory_space=pltpu.MemorySpace.SMEM),
            scratch_shapes=[pltpu.SMEM((1, 1), jnp.float32)],
        ),
        compiler_params=pltpu.CompilerParams(
            dimension_semantics=("arbitrary",),   # reduction axis (accumulator)
        ),
    )(x2, y2, t2)
    return out[0, 0]


def _reference(inputs, targets, xyzr):
    # Pure-JAX reference of the PyTorch module, for verification.
    xyzr_r = jnp.reshape(xyzr, (-1, 4))
    t = targets.astype(jnp.float32)[:, None]
    x = inputs * t
    y = xyzr_r * t
    z = jnp.abs(x - y)
    elem = jnp.where(z < 1.0, 0.5 * z * z, z - 0.5)
    return jnp.mean(elem)


if __name__ == "__main__":
    key = jax.random.PRNGKey(0)
    k1, k2, k3 = jax.random.split(key, 3)

    N = 32  # number of boxes
    inputs = jax.random.normal(k1, (N, 4), dtype=jnp.float32) * 2.0
    xyzr = jax.random.normal(k2, (N * 4,), dtype=jnp.float32) * 2.0  # flat, like .view(-1,4) source
    targets = jax.random.bernoulli(k3, p=0.7, shape=(N,)).astype(jnp.int32)

    loss = smooth_l1_loss(inputs, targets, xyzr)
    loss = jax.block_until_ready(loss)

    ref = jax.block_until_ready(_reference(inputs, targets, xyzr))
    np.testing.assert_allclose(np.asarray(loss), np.asarray(ref), rtol=1e-6, atol=1e-6)

    print("KERNEL_OK")
</pallas_src>

<mosaic_0001>
module attributes {stable_mosaic.version = 11 : i64} {
  func.func @_smooth_l1_kernel(%arg0: i32, %arg1: memref<8x128xf32, #tpu.memory_space<vmem>>, %arg2: memref<8x128xf32, #tpu.memory_space<vmem>>, %arg3: memref<8x128xf32, #tpu.memory_space<vmem>>, %arg4: memref<1x1xf32, #tpu.memory_space<smem>>, %arg5: memref<1x1xf32, #tpu.memory_space<smem>>) attributes {dimension_semantics = [#tpu.dimension_semantics<arbitrary>], iteration_bounds = array<i64: 1>, scalar_prefetch = 0 : i64, scratch_operands = 1 : i64, tpu.core_type = #tpu.core_type<tc>, window_params = [{transform_indices = @transform_0, window_bounds = array<i64: 8, 128>}, {transform_indices = @transform_1, window_bounds = array<i64: 8, 128>}, {transform_indices = @transform_2, window_bounds = array<i64: 8, 128>}, {transform_indices = @transform_3, window_bounds = array<i64: 1, 1>}]} {
    %c0_i32 = arith.constant 0 : i32
    %0 = arith.cmpi eq, %arg0, %c0_i32 : i32
    %1 = arith.extui %0 : i1 to i32
    %c0_i32_0 = arith.constant 0 : i32
    %2 = arith.cmpi ne, %1, %c0_i32_0 : i32
    scf.if %2 {
      %cst_15 = arith.constant 0.000000e+00 : f32
      %c0_16 = arith.constant 0 : index
      %c0_17 = arith.constant 0 : index
      %27 = memref.load %arg5[%c0_16, %c0_17] : memref<1x1xf32, #tpu.memory_space<smem>>
      memref.store %cst_15, %arg5[%c0_16, %c0_17] : memref<1x1xf32, #tpu.memory_space<smem>>
    } else {
    }
    %c0 = arith.constant 0 : index
    %c0_1 = arith.constant 0 : index
    %3 = vector.load %arg1[%c0, %c0_1] : memref<8x128xf32, #tpu.memory_space<vmem>>, vector<8x128xf32>
    %c0_2 = arith.constant 0 : index
    %c0_3 = arith.constant 0 : index
    %4 = vector.load %arg2[%c0_2, %c0_3] : memref<8x128xf32, #tpu.memory_space<vmem>>, vector<8x128xf32>
    %5 = arith.subf %3, %4 : vector<8x128xf32>
    %c0_4 = arith.constant 0 : index
    %c0_5 = arith.constant 0 : index
    %6 = vector.load %arg3[%c0_4, %c0_5] : memref<8x128xf32, #tpu.memory_space<vmem>>, vector<8x128xf32>
    %7 = arith.mulf %5, %6 : vector<8x128xf32>
    %8 = math.absf %7 : vector<8x128xf32>
    %cst = arith.constant 1.000000e+00 : f32
    %9 = vector.broadcast %cst : f32 to vector<8x128xf32>
    %10 = arith.cmpf olt, %8, %9 : vector<8x128xf32>
    %cst_6 = arith.constant 5.000000e-01 : f32
    %11 = vector.broadcast %cst_6 : f32 to vector<8x128xf32>
    %12 = arith.mulf %11, %8 : vector<8x128xf32>
    %13 = arith.mulf %12, %8 : vector<8x128xf32>
    %cst_7 = arith.constant 5.000000e-01 : f32
    %14 = vector.broadcast %cst_7 : f32 to vector<8x128xf32>
    %15 = arith.subf %8, %14 : vector<8x128xf32>
    %16 = arith.select %10, %13, %15 : vector<8x128xi1>, vector<8x128xf32>
    %c0_8 = arith.constant 0 : index
    %c0_9 = arith.constant 0 : index
    %17 = memref.load %arg5[%c0_8, %c0_9] : memref<1x1xf32, #tpu.memory_space<smem>>
    %18 = vector.shape_cast %16 : vector<8x128xf32> to vector<1x8x128xf32>
    %cst_10 = arith.constant dense<0.000000e+00> : vector<1xf32>
    %19 = vector.multi_reduction <add>, %18, %cst_10 [1, 2] : vector<1x8x128xf32> to vector<1xf32>
    %20 = vector.shape_cast %19 : vector<1xf32> to vector<1x1x1xf32>
    %21 = vector.extract %20[0, 0, 0] : f32 from vector<1x1x1xf32>
    %22 = arith.addf %17, %21 : f32
    %c0_11 = arith.constant 0 : index
    %c0_12 = arith.constant 0 : index
    %23 = memref.load %arg5[%c0_11, %c0_12] : memref<1x1xf32, #tpu.memory_space<smem>>
    memref.store %22, %arg5[%c0_11, %c0_12] : memref<1x1xf32, #tpu.memory_space<smem>>
    %c0_i32_13 = arith.constant 0 : i32
    %24 = arith.cmpi eq, %arg0, %c0_i32_13 : i32
    %25 = arith.extui %24 : i1 to i32
    %c0_i32_14 = arith.constant 0 : i32
    %26 = arith.cmpi ne, %25, %c0_i32_14 : i32
    scf.if %26 {
      %c0_15 = arith.constant 0 : index
      %c0_16 = arith.constant 0 : index
      %27 = memref.load %arg5[%c0_15, %c0_16] : memref<1x1xf32, #tpu.memory_space<smem>>
      %cst_17 = arith.constant 7.812500e-03 : f32
      %28 = arith.mulf %27, %cst_17 : f32
      %c0_18 = arith.constant 0 : index
      %c0_19 = arith.constant 0 : index
      %29 = memref.load %arg4[%c0_18, %c0_19] : memref<1x1xf32, #tpu.memory_space<smem>>
      memref.store %28, %arg4[%c0_18, %c0_19] : memref<1x1xf32, #tpu.memory_space<smem>>
    } else {
    }
    return
  }
  func.func @transform_0(%arg0: i32) -> (i32, i32) {
    %c0_i32 = arith.constant 0 : i32
    %c0_i32_0 = arith.constant 0 : i32
    return %arg0, %c0_i32 : i32, i32
  }
  func.func @transform_1(%arg0: i32) -> (i32, i32) {
    %c0_i32 = arith.constant 0 : i32
    %c0_i32_0 = arith.constant 0 : i32
    return %arg0, %c0_i32 : i32, i32
  }
  func.func @transform_2(%arg0: i32) -> (i32, i32) {
    %c0_i32 = arith.constant 0 : i32
    %c0_i32_0 = arith.constant 0 : i32
    return %arg0, %c0_i32 : i32, i32
  }
  func.func @transform_3(%arg0: i32) -> (i32, i32) {
    %c0_i32 = arith.constant 0 : i32
    %c0_i32_0 = arith.constant 0 : i32
    %c0_i32_1 = arith.constant 0 : i32
    return %c0_i32, %c0_i32_0 : i32, i32
  }
}

</mosaic_0001>

<llo_original>
// kernel: tpu_custom_call.1
$region0: #{tpu_custom_call.1}
  #allocation0 [shape = 'u32[]', space=smem, size = 0x4, offset = 0x4, fixed_abs, tag = 'smem constant byte address 0x4 - core index']
  #allocation1 [shape = 'u32[144,128]{1,0:T(1,128)}', space=vmem, size = 0x12000, scoped, tag = 'internal scratch']
  #allocation2 [shape = 'f32[1,1]{1,0:T(1,128)}', space=smem, size = 0x200, scoped, tag = 'scratch operand']
  %s0 = inlined_call_operand.hbm [shape: f32[8,128], index: 0, kind: input, shape index: {}]
  %s1 = inlined_call_operand.hbm [shape: f32[8,128], index: 1, kind: input, shape index: {}]
  %s2 = inlined_call_operand.hbm [shape: f32[8,128], index: 2, kind: input, shape index: {}]
  %s3 = inlined_call_operand.hbm [shape: f32[1,1], index: 3, kind: output, shape index: {}]
  %s4 = sld [smem:[#allocation0]]
  $region42: #{tpu_custom_call.1} parent=0
    _
  %s6 = ssub.s32 1, %s4
  %s7 = scalar_select 0, %s6, %s4
  $region1: #{tpu_custom_call.1} parent=0
    #allocation3 [shape = 'u8[4096]{0}', space=vmem, size = 0x1000, scoped, tag = 'input window, operand 0, single buffered']
    #allocation4 [shape = 's32[1]{0}', space=sflag, size = 0x4, scoped, tag = 'scoped memory for tpu_custom_call.1']
    #allocation5 [shape = 's32[1]{0}', space=sflag, size = 0x4, scoped, tag = 'scoped memory for tpu_custom_call.1']
    #allocation6 [shape = 'u8[4096]{0}', space=vmem, size = 0x1000, scoped, tag = 'input window, operand 1, single buffered']
    #allocation7 [shape = 's32[1]{0}', space=sflag, size = 0x4, scoped, tag = 'scoped memory for tpu_custom_call.1']
    #allocation8 [shape = 'u8[4096]{0}', space=vmem, size = 0x1000, scoped, tag = 'input window, operand 2, single buffered']
    #allocation9 [shape = 'u8[512]{0}', space=smem, size = 0x200, scoped, tag = 'output window, operand 0, single buffered']
    %8 = vsyncpa [#allocation4], 0
    %9 = vsyncpa [#allocation7], 0
    %10 = vsyncpa [#allocation5], 0
    // Predicated region
    $region2: #{tpu_custom_call.1} parent=1 // pred_check
      _
    $region3: #{tpu_custom_call.1} parent=1 // pred_check_branch
      %12 = sbr.rel (0) target = $region5
    $region4: #{tpu_custom_call.1} parent=1 // pred_region
      %s14 = ssub.s32 128, 128
      %15 = vsyncadd [#allocation4], %s14
      %s17 = sshll.u32 [#allocation3], 4
      %s18 = int_to_ptr.vmem [resolvable:$true] %s17
      %20 = dma.hbm_to_vmem [thread:$0]  %s0, 128, %s18, [#allocation4]
    $region5: #{tpu_custom_call.1} parent=1 // pred_fallthru
      _
    // Predicated region
    $region6: #{tpu_custom_call.1} parent=1 // pred_check
      _
    $region7: #{tpu_custom_call.1} parent=1 // pred_check_branch
      %22 = sbr.rel (0) target = $region9
    $region8: #{tpu_custom_call.1} parent=1 // pred_region
      %s24 = ssub.s32 128, 128
      %25 = vsyncadd [#allocation7], %s24
      %s27 = sshll.u32 [#allocation6], 4
      %s28 = int_to_ptr.vmem [resolvable:$true] %s27
      %30 = dma.hbm_to_vmem [thread:$0]  %s1, 128, %s28, [#allocation7]
    $region9: #{tpu_custom_call.1} parent=1 // pred_fallthru
      _
    // Predicated region
    $region10: #{tpu_custom_call.1} parent=1 // pred_check
      _
    $region11: #{tpu_custom_call.1} parent=1 // pred_check_branch
      %32 = sbr.rel (0) target = $region13
    $region12: #{tpu_custom_call.1} parent=1 // pred_region
      %s34 = ssub.s32 128, 128
      %35 = vsyncadd [#allocation7], %s34
      %s37 = sshll.u32 [#allocation8], 4
      %s38 = int_to_ptr.vmem [resolvable:$true] %s37
      %40 = dma.hbm_to_vmem [thread:$0]  %s2, 128, %s38, [#allocation7]
    $region13: #{tpu_custom_call.1} parent=1 // pred_fallthru
      _
    // Predicated region
    $region14: #{tpu_custom_call.1} parent=1 // pred_check
      _
    $region15: #{tpu_custom_call.1} parent=1 // pred_check_branch
      %42 = sbr.rel (0) target = $region17
    $region16: #{tpu_custom_call.1} parent=1 // pred_region
      %43 = dma.done [#allocation4], 128
    $region17: #{tpu_custom_call.1} parent=1 // pred_fallthru
      _
    // Predicated region
    $region18: #{tpu_custom_call.1} parent=1 // pred_check
      _
    $region19: #{tpu_custom_call.1} parent=1 // pred_check_branch
      %45 = sbr.rel (0) target = $region21
    $region20: #{tpu_custom_call.1} parent=1 // pred_region
      %46 = dma.done [#allocation7], 128
    $region21: #{tpu_custom_call.1} parent=1 // pred_fallthru
      _
    // Predicated region
    $region22: #{tpu_custom_call.1} parent=1 // pred_check
      _
    $region23: #{tpu_custom_call.1} parent=1 // pred_check_branch
      %48 = sbr.rel (0) target = $region25
    $region24: #{tpu_custom_call.1} parent=1 // pred_region
      %49 = dma.done [#allocation7], 128
    $region25: #{tpu_custom_call.1} parent=1 // pred_fallthru
      _
    %p50 = scmp.eq.s32.totalorder 0, 0
    // Predicated region
    $region26: #{tpu_custom_call.1} parent=1 // pred_check
      %p51 = pneg %p50
    $region27: #{tpu_custom_call.1} parent=1 // pred_check_branch
      %53 = sbr.rel (%p51) target = $region29
    $region28: #{tpu_custom_call.1} parent=1 // pred_region
      %s54 = scalar_lea.smem [#allocation2], 0
      %55 = sst [smem:[%s54]] 0.0
    $region29: #{tpu_custom_call.1} parent=1 // pred_fallthru
      _
    %v56 = vld [vmem:[#allocation3] sm:$0xff]
    %v57 = vld [vmem:[#allocation6] sm:$0xff]
    %v58 = vsub.f32 %v56, %v57
    %v59 = vld [vmem:[#allocation8] sm:$0xff]
    %v60 = vmul.f32 %v58, %v59
    %v61 = vand.u32 2147483647, %v60
    %vm62 = vcmp.lt.f32.partialorder %v61, 1.0
    %v63 = vmul.f32 %v61, 0.5
    %v64 = vmul.f32 %v63, %v61
    %v65 = vsub.f32 %v61, 0.5
    %v66 = vsel %vm62, %v64, %v65
    %s67 = sld [smem:[#allocation2]]
    %68 = vadd.xlane.f32.xlu0 %v66
    %v69 = vpop.xlane.xlu0 %68
    %v70 = vrot.slane %v69, 4
    %v71 = vadd.f32 %v69, %v70
    %v72 = vrot.slane %v71, 2
    %v73 = vadd.f32 %v71, %v72
    %v74 = vrot.slane %v73, 1
    %v75 = vadd.f32 %v73, %v74
    %s76 = vtos %v75
    %s77 = sadd.f32 %s67, %s76
    %s78 = scalar_lea.smem [#allocation2], 0
    %79 = sst [smem:[%s78]] %s77
    // Predicated region
    $region30: #{tpu_custom_call.1} parent=1 // pred_check
      %p80 = pneg %p50
    $region31: #{tpu_custom_call.1} parent=1 // pred_check_branch
      %82 = sbr.rel (%p80) target = $region33
    $region32: #{tpu_custom_call.1} parent=1 // pred_region
      %s83 = sld [smem:[#allocation2]]
      %s84 = smul.f32 %s83, 0.0078125
      %s85 = scalar_lea.smem [#allocation9], 0
      %86 = sst [smem:[%s85]] %s84
    $region33: #{tpu_custom_call.1} parent=1 // pred_fallthru
      _
    // Predicated region
    $region34: #{tpu_custom_call.1} parent=1 // pred_check
      _
    $region35: #{tpu_custom_call.1} parent=1 // pred_check_branch
      %88 = sbr.rel (0) target = $region37
    $region36: #{tpu_custom_call.1} parent=1 // pred_region
      %s90 = ssub.s32 16, 16
      %91 = vsyncadd [#allocation5], %s90
      %94 = dma.smem_to_hbm [#allocation9], 16, %s3, [#allocation5]
    $region37: #{tpu_custom_call.1} parent=1 // pred_fallthru
      _
    // Predicated region
    $region38: #{tpu_custom_call.1} parent=1 // pred_check
      _
    $region39: #{tpu_custom_call.1} parent=1 // pred_check_branch
      %96 = sbr.rel (0) target = $region41
    $region40: #{tpu_custom_call.1} parent=1 // pred_region
      %97 = dma.done [#allocation5], 16
    $region41: #{tpu_custom_call.1} parent=1 // pred_fallthru
      _
    %98 = sfence
    %99 = vsyncpa [#allocation4], 1
    %100 = vsyncpa [#allocation7], 1
    %101 = vsyncpa [#allocation5], 1

</llo_original>
